<compile_context>
chip_gen: v7x
topology: tpu7x:2x2x1
jax: 0.10.0
libtpu: 0.0.40
codegen_flags: <defaults>
</compile_context>

<pallas_src>
import functools

import jax
import jax.numpy as jnp
from jax import lax
from jax.experimental import pallas as pl
from jax.experimental.pallas import tpu as pltpu


def _cov_ema_kernel(z_ref, R_ref, newR_ref, psum_ref, *, la_R, true_N):
    """Grid = (pair, batch-tile). Accumulate Gram in newR_ref; finalize EMA."""
    k = pl.program_id(1)
    nk = pl.num_programs(1)

    @pl.when(k == 0)
    def _init():
        newR_ref[...] = jnp.zeros_like(newR_ref)
        psum_ref[...] = jnp.zeros_like(psum_ref)

    z = z_ref[...]                                       # (tN, D), native dtype

    # Gram accumulated directly in the resident f32 output block (MXU, f32 acc).
    newR_ref[...] += lax.dot_general(
        z, z,
        dimension_numbers=(((0,), (0,)), ((), ())),      # z^T @ z over the batch axis
        preferred_element_type=jnp.float32,
    )

    # Column partial sums: reduce over the leading (vreg-group) axis only, i.e.
    # pure elementwise vreg adds; the cross-sublane shuffle is paid once at the
    # finalize step instead of every grid step.
    zf = z.astype(jnp.float32)
    psum_ref[...] += jnp.sum(zf.reshape(-1, 8, zf.shape[-1]), axis=0)

    @pl.when(k == nk - 1)
    def _finalize():
        inv_n = jnp.float32(1.0 / true_N)
        s = jnp.sum(psum_ref[...], axis=0, keepdims=True)    # (1, D) == N * mu
        outer = lax.dot_general(                             # s^T @ s (rank-1, D x D)
            s, s,
            dimension_numbers=(((0,), (0,)), ((), ())),
            preferred_element_type=jnp.float32,
        )
        cov = (newR_ref[...] - outer * inv_n) * inv_n        # Gram/N - mu mu^T
        newR_ref[...] = (
            jnp.float32(la_R) * R_ref[...] + jnp.float32(1.0 - la_R) * cov
        )


def _vmem_capacity_bytes():
    """Physical per-core VMEM; conservative 64 MiB fallback (fits every gen)."""
    try:
        return int(pltpu.get_tpu_info().vmem_capacity_bytes)
    except Exception:
        return 64 * 1024 * 1024


def _plan_batch_tiling(N, D, itemsize, z_budget_bytes, max_tile=8192):
    """Pick (tN, nk, padded_N): double-buffered z slab fits z_budget_bytes."""
    align = 16 if itemsize < 4 else 8
    cdiv = lambda a, b: -(-a // b)
    rnd = lambda x: cdiv(x, align) * align
    # Largest tile whose 2x-buffered slab fits the budget, ceiling at max_tile.
    cap = max(align, (z_budget_bytes // (2 * D * itemsize)) // align * align)
    cap = min(cap, max_tile)
    if rnd(N) <= cap:
        tn, nk = rnd(N), 1
    else:
        nk = cdiv(rnd(N), cap)
        tn = rnd(cdiv(N, nk))
    return tn, nk, tn * nk


def cov_ema_update_pair(z_pair, R_pair, la_R):
    """z_pair: (2, N, D); R_pair: (2, D, D) f32  ->  new_R: (2, D, D) f32."""
    P, N, D = z_pair.shape
    itemsize = z_pair.dtype.itemsize

    cap = _vmem_capacity_bytes()
    usable = int(cap * 0.8)                          # headroom for compiler scratch
    fixed = 4 * D * D * 4 + 8 * D * 4                # R (x2 buf) + new_R (x2 buf) + psum
    z_budget = max(0, int(usable * 0.7) - fixed)
    # TODO(synk): for very large D (>= ~1.5K on v7x) the DxD residency itself
    # exceeds the budget; that regime needs a D-tiled output grid axis.
    tn, nk, padded_N = _plan_batch_tiling(N, D, itemsize, z_budget)

    if padded_N != N:
        # Zero rows contribute nothing to Gram/column sums; kernel divides by true N.
        z_pair = jnp.pad(z_pair, ((0, 0), (0, padded_N - N), (0, 0)))

    kernel = functools.partial(_cov_ema_kernel, la_R=float(la_R), true_N=N)

    need = 2 * tn * D * itemsize + fixed
    vmem_limit = min(int(cap * 0.85), max(32 * 1024 * 1024, 2 * need))
    vmem_limit = max(vmem_limit, need + (2 << 20))   # never below actual need

    cost = pl.CostEstimate(
        flops=2 * P * padded_N * D * D,
        transcendentals=0,
        bytes_accessed=P * (padded_N * D * itemsize + 2 * D * D * 4),
    )

    return pl.pallas_call(
        kernel,
        out_shape=jax.ShapeDtypeStruct((P, D, D), jnp.float32),
        grid_spec=pltpu.PrefetchScalarGridSpec(
            num_scalar_prefetch=0,
            grid=(P, nk),
            in_specs=[
                pl.BlockSpec((None, tn, D), lambda p, k: (p, k, 0)),
                pl.BlockSpec((None, D, D), lambda p, k: (p, 0, 0)),
            ],
            out_specs=pl.BlockSpec((None, D, D), lambda p, k: (p, 0, 0)),
            scratch_shapes=[
                pltpu.VMEM((8, D), jnp.float32),     # column partial-sum accumulator
            ],
        ),
        # new_R overwrites the R buffer, matching the in-place self.R update.
        input_output_aliases={1: 0},
        cost_estimate=cost,
        compiler_params=pltpu.CompilerParams(
            dimension_semantics=("parallel", "arbitrary"),
            vmem_limit_bytes=int(vmem_limit),
        ),
    )(z_pair, R_pair)


def covariance_loss_v6(z1, z2, R1, R2, *, la_R, R_eps_weight):
    """Functional equivalent of CovarianceLossv6.forward.

    Returns (cov_loss, new_R1, new_R2); the caller carries new_R1/new_R2 as the
    updated buffers (PyTorch mutates self.R1/self.R2).
    """
    _, D = z1.shape
    # bf16 fast path: z streams in the caller's dtype (f32 acc inside the kernel).
    z_pair = jnp.stack([z1, z2], axis=0)
    R_pair = jnp.stack([R1, R2], axis=0).astype(jnp.float32)
    new_R = cov_ema_update_pair(z_pair, R_pair, la_R)

    # TODO(synk): logdet has no Pallas primitive (needs LU/Cholesky); eps*I add
    # and slogdet are done in plain JAX/XLA on the (2, D, D) batch.
    eps_eye = jnp.float32(R_eps_weight) * jnp.eye(D, dtype=jnp.float32)
    _, logdets = jnp.linalg.slogdet(new_R + eps_eye)
    cov_loss = -jnp.sum(logdets) / D
    return cov_loss, new_R[0], new_R[1]


def _reference(z1, z2, R1, R2, la_R, eps_w):
    def upd(z, R):
        N = z.shape[0]
        mu = jnp.mean(z, axis=0)
        zh = z - mu
        Rupd = zh.T @ zh / N
        return la_R * R + (1.0 - la_R) * Rupd

    D = z1.shape[1]
    nR1 = upd(z1, R1)
    nR2 = upd(z2, R2)
    eps = eps_w * jnp.eye(D, dtype=jnp.float32)
    loss = -(jnp.linalg.slogdet(nR1 + eps)[1] + jnp.linalg.slogdet(nR2 + eps)[1]) / D
    return loss, nR1, nR2


if __name__ == "__main__":
    # args stand-ins (deterministic, in-script)
    N, D = 8, 128               # batch, projector output dim
    R_ini = 1.0
    la_R = 0.01
    R_eps_weight = 1e-6

    key = jax.random.PRNGKey(0)
    k1, k2 = jax.random.split(key)
    z1 = jax.random.normal(k1, (N, D), dtype=jnp.float32)
    z2 = jax.random.normal(k2, (N, D), dtype=jnp.float32)

    # R1, R2 initialized as in __init__: R_ini * eye(D)
    R1 = R_ini * jnp.eye(D, dtype=jnp.float32)
    R2 = R_ini * jnp.eye(D, dtype=jnp.float32)

    loss, new_R1, new_R2 = covariance_loss_v6(
        z1, z2, R1, R2, la_R=la_R, R_eps_weight=R_eps_weight
    )
    jax.block_until_ready((loss, new_R1, new_R2))

    ref_loss, ref_R1, ref_R2 = _reference(z1, z2, R1, R2, la_R, R_eps_weight)
    assert jnp.allclose(new_R1, ref_R1, rtol=1e-4, atol=1e-5), "new_R1 mismatch"
    assert jnp.allclose(new_R2, ref_R2, rtol=1e-4, atol=1e-5), "new_R2 mismatch"
    # logdet of the near-singular (rank N << D) covariance amplifies f32
    # rounding; use a slightly looser (still tight relative to |loss| ~ 8)
    # tolerance for the scalar loss.
    assert jnp.allclose(loss, ref_loss, rtol=5e-4, atol=1e-4), "loss mismatch"

    print("KERNEL_OK")
</pallas_src>

<mosaic_0001>
module attributes {stable_mosaic.version = 11 : i64} {
  func.func @_cov_ema_kernel(%arg0: i32, %arg1: i32, %arg2: memref<1x8x128xf32, #tpu.memory_space<vmem>>, %arg3: memref<1x128x128xf32, #tpu.memory_space<vmem>>, %arg4: memref<1x128x128xf32, #tpu.memory_space<vmem>>, %arg5: memref<8x128xf32, #tpu.memory_space<vmem>>) attributes {dimension_semantics = [#tpu.dimension_semantics<parallel>, #tpu.dimension_semantics<arbitrary>], iteration_bounds = array<i64: 2, 1>, scalar_prefetch = 0 : i64, scratch_operands = 1 : i64, tpu.core_type = #tpu.core_type<tc>, window_params = [{transform_indices = @transform_0, window_bounds = array<i64: 1, 8, 128>}, {transform_indices = @transform_1, window_bounds = array<i64: 1, 128, 128>}, {transform_indices = @transform_2, window_bounds = array<i64: 1, 128, 128>}]} {
    %c0_i32 = arith.constant 0 : i32
    %0 = arith.cmpi eq, %arg1, %c0_i32 : i32
    %1 = arith.extui %0 : i1 to i32
    %c0_i32_0 = arith.constant 0 : i32
    %2 = arith.cmpi ne, %1, %c0_i32_0 : i32
    scf.if %2 {
      %cst_16 = arith.constant 0.000000e+00 : f32
      %20 = vector.broadcast %cst_16 : f32 to vector<128x128xf32>
      %c0_17 = arith.constant 0 : index
      %c0_18 = arith.constant 0 : index
      %c0_19 = arith.constant 0 : index
      %21 = vector.load %arg4[%c0_17, %c0_18, %c0_19] : memref<1x128x128xf32, #tpu.memory_space<vmem>>, vector<1x128x128xf32>
      %22 = vector.shape_cast %21 : vector<1x128x128xf32> to vector<128x128xf32>
      %23 = vector.shape_cast %20 : vector<128x128xf32> to vector<1x128x128xf32>
      tpu.vector_store %arg4[%c0_17, %c0_18, %c0_19], %23 {strides = array<i32>} : memref<1x128x128xf32, #tpu.memory_space<vmem>>, vector<1x128x128xf32>,
      %cst_20 = arith.constant 0.000000e+00 : f32
      %24 = vector.broadcast %cst_20 : f32 to vector<8x128xf32>
      %c0_21 = arith.constant 0 : index
      %c0_22 = arith.constant 0 : index
      %25 = vector.load %arg5[%c0_21, %c0_22] : memref<8x128xf32, #tpu.memory_space<vmem>>, vector<8x128xf32>
      tpu.vector_store %arg5[%c0_21, %c0_22], %24 {strides = array<i32>} : memref<8x128xf32, #tpu.memory_space<vmem>>, vector<8x128xf32>,
    } else {
    }
    %c0 = arith.constant 0 : index
    %c0_1 = arith.constant 0 : index
    %c0_2 = arith.constant 0 : index
    %3 = vector.load %arg2[%c0, %c0_1, %c0_2] : memref<1x8x128xf32, #tpu.memory_space<vmem>>, vector<1x8x128xf32>
    %4 = vector.shape_cast %3 : vector<1x8x128xf32> to vector<8x128xf32>
    %c0_3 = arith.constant 0 : index
    %c0_4 = arith.constant 0 : index
    %c0_5 = arith.constant 0 : index
    %5 = vector.load %arg4[%c0_3, %c0_4, %c0_5] : memref<1x128x128xf32, #tpu.memory_space<vmem>>, vector<1x128x128xf32>
    %6 = vector.shape_cast %5 : vector<1x128x128xf32> to vector<128x128xf32>
    %cst = arith.constant dense<0.000000e+00> : vector<128x128xf32>
    %7 = tpu.matmul %4, %4, %cst {dimension_numbers = #tpu.dot_dimension_numbers<[0], [0], [1], [1], [0, 1, 1, 1], [], []>} : vector<8x128xf32>, vector<8x128xf32>, vector<128x128xf32> -> vector<128x128xf32>
    %8 = arith.addf %6, %7 : vector<128x128xf32>
    %c0_6 = arith.constant 0 : index
    %c0_7 = arith.constant 0 : index
    %c0_8 = arith.constant 0 : index
    %9 = vector.load %arg4[%c0_6, %c0_7, %c0_8] : memref<1x128x128xf32, #tpu.memory_space<vmem>>, vector<1x128x128xf32>
    %10 = vector.shape_cast %9 : vector<1x128x128xf32> to vector<128x128xf32>
    %11 = vector.shape_cast %8 : vector<128x128xf32> to vector<1x128x128xf32>
    tpu.vector_store %arg4[%c0_6, %c0_7, %c0_8], %11 {strides = array<i32>} : memref<1x128x128xf32, #tpu.memory_space<vmem>>, vector<1x128x128xf32>,
    %c0_9 = arith.constant 0 : index
    %c0_10 = arith.constant 0 : index
    %12 = vector.load %arg5[%c0_9, %c0_10] : memref<8x128xf32, #tpu.memory_space<vmem>>, vector<8x128xf32>
    %13 = vector.shape_cast %4 : vector<8x128xf32> to vector<1x8x128xf32>
    %cst_11 = arith.constant dense<0.000000e+00> : vector<8x128xf32>
    %14 = vector.multi_reduction <add>, %13, %cst_11 [0] : vector<1x8x128xf32> to vector<8x128xf32>
    %15 = arith.addf %12, %14 : vector<8x128xf32>
    %c0_12 = arith.constant 0 : index
    %c0_13 = arith.constant 0 : index
    %16 = vector.load %arg5[%c0_12, %c0_13] : memref<8x128xf32, #tpu.memory_space<vmem>>, vector<8x128xf32>
    tpu.vector_store %arg5[%c0_12, %c0_13], %15 {strides = array<i32>} : memref<8x128xf32, #tpu.memory_space<vmem>>, vector<8x128xf32>,
    %c0_i32_14 = arith.constant 0 : i32
    %17 = arith.cmpi eq, %arg1, %c0_i32_14 : i32
    %18 = arith.extui %17 : i1 to i32
    %c0_i32_15 = arith.constant 0 : i32
    %19 = arith.cmpi ne, %18, %c0_i32_15 : i32
    scf.if %19 {
      %c0_16 = arith.constant 0 : index
      %c0_17 = arith.constant 0 : index
      %20 = vector.load %arg5[%c0_16, %c0_17] : memref<8x128xf32, #tpu.memory_space<vmem>>, vector<8x128xf32>
      %cst_18 = arith.constant dense<0.000000e+00> : vector<128xf32>
      %21 = vector.multi_reduction <add>, %20, %cst_18 [0] : vector<8x128xf32> to vector<128xf32>
      %22 = vector.shape_cast %21 : vector<128xf32> to vector<1x128xf32>
      %cst_19 = arith.constant dense<0.000000e+00> : vector<128x128xf32>
      %23 = tpu.matmul %22, %22, %cst_19 {dimension_numbers = #tpu.dot_dimension_numbers<[0], [0], [1], [1], [0, 1, 1, 1], [], []>} : vector<1x128xf32>, vector<1x128xf32>, vector<128x128xf32> -> vector<128x128xf32>
      %c0_20 = arith.constant 0 : index
      %c0_21 = arith.constant 0 : index
      %c0_22 = arith.constant 0 : index
      %24 = vector.load %arg4[%c0_20, %c0_21, %c0_22] : memref<1x128x128xf32, #tpu.memory_space<vmem>>, vector<1x128x128xf32>
      %25 = vector.shape_cast %24 : vector<1x128x128xf32> to vector<128x128xf32>
      %cst_23 = arith.constant 1.250000e-01 : f32
      %26 = vector.broadcast %cst_23 : f32 to vector<128x128xf32>
      %27 = arith.mulf %23, %26 : vector<128x128xf32>
      %28 = arith.subf %25, %27 : vector<128x128xf32>
      %cst_24 = arith.constant 1.250000e-01 : f32
      %29 = vector.broadcast %cst_24 : f32 to vector<128x128xf32>
      %30 = arith.mulf %28, %29 : vector<128x128xf32>
      %c0_25 = arith.constant 0 : index
      %c0_26 = arith.constant 0 : index
      %c0_27 = arith.constant 0 : index
      %31 = vector.load %arg3[%c0_25, %c0_26, %c0_27] : memref<1x128x128xf32, #tpu.memory_space<vmem>>, vector<1x128x128xf32>
      %32 = vector.shape_cast %31 : vector<1x128x128xf32> to vector<128x128xf32>
      %cst_28 = arith.constant 0.00999999977 : f32
      %33 = vector.broadcast %cst_28 : f32 to vector<128x128xf32>
      %34 = arith.mulf %33, %32 : vector<128x128xf32>
      %cst_29 = arith.constant 9.900000e-01 : f32
      %35 = vector.broadcast %cst_29 : f32 to vector<128x128xf32>
      %36 = arith.mulf %35, %30 : vector<128x128xf32>
      %37 = arith.addf %34, %36 : vector<128x128xf32>
      %c0_30 = arith.constant 0 : index
      %c0_31 = arith.constant 0 : index
      %c0_32 = arith.constant 0 : index
      %38 = vector.load %arg4[%c0_30, %c0_31, %c0_32] : memref<1x128x128xf32, #tpu.memory_space<vmem>>, vector<1x128x128xf32>
      %39 = vector.shape_cast %38 : vector<1x128x128xf32> to vector<128x128xf32>
      %40 = vector.shape_cast %37 : vector<128x128xf32> to vector<1x128x128xf32>
      tpu.vector_store %arg4[%c0_30, %c0_31, %c0_32], %40 {strides = array<i32>} : memref<1x128x128xf32, #tpu.memory_space<vmem>>, vector<1x128x128xf32>,
    } else {
    }
    return
  }
  func.func @transform_0(%arg0: i32, %arg1: i32) -> (i32, i32, i32) {
    %c0_i32 = arith.constant 0 : i32
    %c0_i32_0 = arith.constant 0 : i32
    return %arg0, %arg1, %c0_i32 : i32, i32, i32
  }
  func.func @transform_1(%arg0: i32, %arg1: i32) -> (i32, i32, i32) {
    %c0_i32 = arith.constant 0 : i32
    %c0_i32_0 = arith.constant 0 : i32
    %c0_i32_1 = arith.constant 0 : i32
    return %arg0, %c0_i32, %c0_i32_0 : i32, i32, i32
  }
  func.func @transform_2(%arg0: i32, %arg1: i32) -> (i32, i32, i32) {
    %c0_i32 = arith.constant 0 : i32
    %c0_i32_0 = arith.constant 0 : i32
    %c0_i32_1 = arith.constant 0 : i32
    return %arg0, %c0_i32, %c0_i32_0 : i32, i32, i32
  }
}

</mosaic_0001>

<llo_original>
// kernel: tpu_custom_call.1
$region0: #{tpu_custom_call.1}
  #allocation0 [shape = 'u32[]', space=smem, size = 0x4, offset = 0x4, fixed_abs, tag = 'smem constant byte address 0x4 - core index']
  #allocation1 [shape = 'u32[144,128]{1,0:T(1,128)}', space=vmem, size = 0x12000, scoped, tag = 'internal scratch']
  #allocation2 [shape = 'f32[8,128]{1,0:T(8,128)}', space=vmem, size = 0x1000, scoped, tag = 'scratch operand']
  %s0 = inlined_call_operand.vmem [shape: f32[2,8,128], index: 0, kind: input, shape index: {}]
  %s1 = inlined_call_operand.hbm [shape: f32[2,128,128], index: 1, kind: input, shape index: {}, may-alias: {1,2}]
  %s2 = inlined_call_operand.hbm [shape: f32[2,128,128], index: 2, kind: output, shape index: {}, may-alias: {1,2}]
  %s3 = sld [smem:[#allocation0]]
  $region53: #{tpu_custom_call.1} parent=0
    _
  %s5 = ssub.s32 1, %s3
  %s6 = scalar_select 0, %s5, %s3
  $region1: #{tpu_custom_call.1} parent=0
    #allocation3 [shape = 'u8[131072]{0}', space=vmem, size = 0x20000, scoped, tag = 'input window, operand 1']
    #allocation4 [shape = 's32[2]{0}', space=sflag, size = 0x8, scoped, tag = 'scoped memory for tpu_custom_call.1']
    #allocation5 [shape = 's32[2]{0}', space=sflag, size = 0x8, scoped, tag = 'scoped memory for tpu_custom_call.1']
    #allocation6 [shape = 'u8[131072]{0}', space=vmem, size = 0x20000, scoped, tag = 'output window, operand 0']
    %7 = vsyncpa [#allocation4], 0
    %s8 = scalar_lea.sflag [#allocation4], 1
    %9 = vsyncpa %s8, 0
    %10 = vsyncpa [#allocation5], 0
    %s11 = scalar_lea.sflag [#allocation5], 1
    %12 = vsyncpa %s11, 0
    loop: start=0, step=1, limit=4
    $region2: #{tpu_custom_call.1} parent=1 // loop_pre_header
      _
    $region3: #{tpu_custom_call.1} parent=1 // loop_header
      %s14 = sphi 0, %s18
      %p15 = scmp.ge.s32.totalorder %s14, 4
      %s21 = sphi 0, %s33
      %s22 = sphi 0, %s29
      %s23 = sphi 0, %s21
      %s24 = sphi 0, %s22
      %s25 = sphi 0, %s23
      %s26 = sphi 0, %s24
      %s38 = sphi 0, %s40
      %s41 = sphi 0, %s38
      %s42 = sphi 0, %s41
      %s58 = sphi 0, %s42
      %s64 = sphi 0, %s66
      %s67 = sphi 0, %s64
      %s68 = sphi 0, %s67
      %s84 = sphi 0, %s68
      %s90 = sphi 0, %s92
      %s93 = sphi 0, %s90
      %s94 = sphi 0, %s93
      %s110 = sphi 0, %s94
    $region4: #{tpu_custom_call.1} parent=1 // loop_header_branch
      %17 = sbr.rel (%p15) target = $region8
    $region5: #{tpu_custom_call.1} parent=1 // loop_body
      %s19 = ssub.s32 %s14, 1
      %s20 = ssub.s32 %s14, 2
      %s27 = sadd.s32 1, %s22
      %p28 = scmp.ge.s32.totalorder %s27, 1
      %s29 = scalar_select %p28, 0, %s27
      %s30 = sadd.s32 1, %s21
      %s31 = scalar_select %p28, %s30, %s21
      %p32 = scmp.ge.s32.totalorder %s31, 2
      %s33 = scalar_select %p32, 0, %s31
      %s34 = ssub.s32 %s21, %s33
      %s35 = ssub.s32 %s22, %s29
      %s36 = sor.u32 %s34, %s35
      %p37 = scmp.eq.s32.totalorder %s36, 0
      %s39 = sadd.s32 %s38, 1
      %s40 = scalar_select %p37, %s38, %s39
      %p43 = pneg %p37
      %p44 = scmp.eq.s32.totalorder %s14, 1
      %p45 = por %p43, %p44
      %p46 = scmp.ne.s32.totalorder %s38, %s41
      %p47 = scmp.eq.s32.totalorder %s14, 0
      %p48 = por %p46, %p47
      %p49 = scmp.ne.s32.totalorder %s38, %s41
      %p50 = scmp.eq.s32.totalorder %s19, 1
      %p51 = por %p49, %p50
      %p52 = scmp.ne.s32.totalorder %s41, %s42
      %p53 = scmp.eq.s32.totalorder %s19, 0
      %p54 = por %p52, %p53
      %p55 = scmp.ne.s32.totalorder %s41, %s42
      %p56 = scmp.eq.s32.totalorder %s20, 1
      %p57 = por %p55, %p56
      %p59 = scmp.ne.s32.totalorder %s42, %s58
      %p60 = scmp.eq.s32.totalorder %s20, 0
      %p61 = por %p59, %p60
      %s62 = ssub.s32 %s21, %s33
      %p63 = scmp.eq.s32.totalorder %s62, 0
      %s65 = sadd.s32 %s64, 1
      %s66 = scalar_select %p63, %s64, %s65
      %p69 = pneg %p63
      %p70 = scmp.eq.s32.totalorder %s14, 1
      %p71 = por %p69, %p70
      %p72 = scmp.ne.s32.totalorder %s64, %s67
      %p73 = scmp.eq.s32.totalorder %s14, 0
      %p74 = por %p72, %p73
      %p75 = scmp.ne.s32.totalorder %s64, %s67
      %p76 = scmp.eq.s32.totalorder %s19, 1
      %p77 = por %p75, %p76
      %p78 = scmp.ne.s32.totalorder %s67, %s68
      %p79 = scmp.eq.s32.totalorder %s19, 0
      %p80 = por %p78, %p79
      %p81 = scmp.ne.s32.totalorder %s67, %s68
      %p82 = scmp.eq.s32.totalorder %s20, 1
      %p83 = por %p81, %p82
      %p85 = scmp.ne.s32.totalorder %s68, %s84
      %p86 = scmp.eq.s32.totalorder %s20, 0
      %p87 = por %p85, %p86
      %s88 = ssub.s32 %s21, %s33
      %p89 = scmp.eq.s32.totalorder %s88, 0
      %s91 = sadd.s32 %s90, 1
      %s92 = scalar_select %p89, %s90, %s91
      %p95 = pneg %p89
      %p96 = scmp.eq.s32.totalorder %s14, 1
      %p97 = por %p95, %p96
      %p98 = scmp.ne.s32.totalorder %s90, %s93
      %p99 = scmp.eq.s32.totalorder %s14, 0
      %p100 = por %p98, %p99
      %p101 = scmp.ne.s32.totalorder %s90, %s93
      %p102 = scmp.eq.s32.totalorder %s19, 1
      %p103 = por %p101, %p102
      %p104 = scmp.ne.s32.totalorder %s93, %s94
      %p105 = scmp.eq.s32.totalorder %s19, 0
      %p106 = por %p104, %p105
      %p107 = scmp.ne.s32.totalorder %s93, %s94
      %p108 = scmp.eq.s32.totalorder %s20, 1
      %p109 = por %p107, %p108
      %p111 = scmp.ne.s32.totalorder %s94, %s110
      %p112 = scmp.eq.s32.totalorder %s20, 0
      %p113 = por %p111, %p112
      %p114 = scmp.le.s32.totalorder 1, %s14
      %p115 = scmp.lt.s32.totalorder %s14, 3
      %p116 = pnand %p114, %p115
      %p117 = pneg %p116
      // Predicated region
      $region9: #{tpu_custom_call.1} parent=5 // pred_check
        _
      $region10: #{tpu_custom_call.1} parent=5 // pred_check_branch
        %119 = sbr.rel (%p116) target = $region12
      $region11: #{tpu_custom_call.1} parent=5 // pred_region
        %s120 = ssub.s32 %s14, 1
      $region12: #{tpu_custom_call.1} parent=5 // pred_fallthru
        _
      %p121 = scmp.lt.s32.totalorder %s14, 2
      // Predicated region
      $region13: #{tpu_custom_call.1} parent=5 // pred_check
        %p122 = pneg %p121
      $region14: #{tpu_custom_call.1} parent=5 // pred_check_branch
        %124 = sbr.rel (%p122) target = $region16
      $region15: #{tpu_custom_call.1} parent=5 // pred_region
        // Predicated region
        $region17: #{tpu_custom_call.1} parent=15 // pred_check
          %p125 = pneg %p48
        $region18: #{tpu_custom_call.1} parent=15 // pred_check_branch
          %127 = sbr.rel (%p125) target = $region20
        $region19: #{tpu_custom_call.1} parent=15 // pred_region
          %p128 = scmp.lt.s32.totalorder %s21, 1
          %s129 = scalar_select %p128, %s21, 1
          %p130 = scmp.lt.s32.totalorder %s22, 0
          %s131 = scalar_select %p130, %s22, 0
          %s132 = sadd.s32 %s131, %s129
          %s133 = smul.addr %s132, 8
          %s134 = scalar_lea.vmem %s0, %s133
        $region20: #{tpu_custom_call.1} parent=15 // pred_fallthru
          _
        // Predicated region
        $region21: #{tpu_custom_call.1} parent=15 // pred_check
          %p135 = pneg %p74
        $region22: #{tpu_custom_call.1} parent=15 // pred_check_branch
          %137 = sbr.rel (%p135) target = $region24
        $region23: #{tpu_custom_call.1} parent=15 // pred_region
          %s138 = sand.u32 %s64, 1
          %s139 = scalar_lea.sflag [#allocation4], %s138
          %s140 = sand.u32 %s64, 1
          %s141 = smul.addr %s140, 128
          %s142 = scalar_lea.vmem [#allocation3], %s141
          %s144 = ssub.s32 2048, 2048
          %145 = vsyncadd %s139, %s144
          %s146 = smul.addr %s21, 16
          %s147 = smul.addr %s146, 128
          %s148 = scalar_lea.hbm %s1, %s147
          %s149 = sshll.u32 %s142, 4
          %s150 = int_to_ptr.vmem [resolvable:$true] %s149
          %155 = dma.hbm_to_vmem [thread:$0]  %s148, 2048, %s150, %s139, 128, 128, 8
        $region24: #{tpu_custom_call.1} parent=15 // pred_fallthru
          _
      $region16: #{tpu_custom_call.1} parent=5 // pred_fallthru
        _
      %p156 = scmp.le.s32.totalorder 1, %s14
      %p157 = scmp.lt.s32.totalorder %s14, 3
      %p158 = pnand %p156, %p157
      %p159 = pneg %p158
      // Predicated region
      $region25: #{tpu_custom_call.1} parent=5 // pred_check
        _
      $region26: #{tpu_custom_call.1} parent=5 // pred_check_branch
        %161 = sbr.rel (%p158) target = $region28
      $region27: #{tpu_custom_call.1} parent=5 // pred_region
        %s162 = ssub.s32 %s14, 1
        %s163 = sand.u32 %s67, 1
        %s164 = scalar_lea.sflag [#allocation4], %s163
        %s165 = sand.u32 %s67, 1
        %s166 = smul.addr %s165, 128
        %s167 = scalar_lea.vmem [#allocation3], %s166
        // Predicated region
        $region29: #{tpu_custom_call.1} parent=27 // pred_check
          %p168 = pneg %p80
        $region30: #{tpu_custom_call.1} parent=27 // pred_check_branch
          %170 = sbr.rel (%p168) target = $region32
        $region31: #{tpu_custom_call.1} parent=27 // pred_region
          %171 = dma.done %s164, 2048
        $region32: #{tpu_custom_call.1} parent=27 // pred_fallthru
          _
        %p172 = scmp.lt.s32.totalorder %s23, 1
        %s173 = scalar_select %p172, %s23, 1
        %p174 = scmp.lt.s32.totalorder %s24, 0
        %s175 = scalar_select %p174, %s24, 0
        %s176 = sadd.s32 %s175, %s173
        %s177 = smul.addr %s176, 8
        %s178 = scalar_lea.vmem %s0, %s177
        %p179 = pneg %p54
        %p180 = pneg %p51
        %s181 = sand.u32 %s67, 1
        %s182 = scalar_lea.sflag [#allocation4], %s181
        %s183 = sand.u32 %s67, 1
        %s184 = smul.addr %s183, 128
        %s185 = scalar_lea.vmem [#allocation3], %s184
        %p186 = pneg %p80
        %p187 = pneg %p77
        %p188 = pneg %p106
        %p189 = pneg %p103
        %s190 = sand.u32 %s93, 1
        %s191 = scalar_lea.sflag [#allocation5], %s190
        %s192 = sand.u32 %s93, 1
        %s193 = smul.addr %s192, 128
        %s194 = scalar_lea.vmem [#allocation6], %s193
        %p195 = scmp.lt.s32.totalorder %s23, 1
        %s196 = scalar_select %p195, %s23, 1
        %p197 = scmp.lt.s32.totalorder %s24, 0
        %s198 = scalar_select %p197, %s24, 0
        %s199 = sadd.s32 %s198, %s196
        %s200 = smul.addr %s199, 8
        %s201 = scalar_lea.vmem %s0, %s200
        %p202 = scmp.eq.s32.totalorder %s24, 0
        // Predicated region
        $region33: #{tpu_custom_call.1} parent=27 // pred_check
          %p203 = pneg %p202
        $region34: #{tpu_custom_call.1} parent=27 // pred_check_branch
          %205 = sbr.rel (%p203) target = $region36
        $region35: #{tpu_custom_call.1} parent=27 // pred_region
          %206 = vst [vmem:[%s194] sm:$0xff] 0.0
          %207 = vst [vmem:[%s194 + $0x8] sm:$0xff] 0.0
          %208 = vst [vmem:[%s194 + $0x10] sm:$0xff] 0.0
          %209 = vst [vmem:[%s194 + $0x18] sm:$0xff] 0.0
          %210 = vst [vmem:[%s194 + $0x20] sm:$0xff] 0.0
          %211 = vst [vmem:[%s194 + $0x28] sm:$0xff] 0.0
          %212 = vst [vmem:[%s194 + $0x30] sm:$0xff] 0.0
          %213 = vst [vmem:[%s194 + $0x38] sm:$0xff] 0.0
          %214 = vst [vmem:[%s194 + $0x40] sm:$0xff] 0.0
          %215 = vst [vmem:[%s194 + $0x48] sm:$0xff] 0.0
          %216 = vst [vmem:[%s194 + $0x50] sm:$0xff] 0.0
          %217 = vst [vmem:[%s194 + $0x58] sm:$0xff] 0.0
          %218 = vst [vmem:[%s194 + $0x60] sm:$0xff] 0.0
          %219 = vst [vmem:[%s194 + $0x68] sm:$0xff] 0.0
          %220 = vst [vmem:[%s194 + $0x70] sm:$0xff] 0.0
          %221 = vst [vmem:[%s194 + $0x78] sm:$0xff] 0.0
          %222 = vst [vmem:[#allocation2] sm:$0xff] 0.0
        $region36: #{tpu_custom_call.1} parent=27 // pred_fallthru
          _
        %v223 = vld [vmem:[%s201] sm:$0xff]
        %v224 = vld [vmem:[%s194] sm:$0xff]
        %v225 = vld [vmem:[%s194 + $0x8] sm:$0xff]
        %v226 = vld [vmem:[%s194 + $0x10] sm:$0xff]
        %v227 = vld [vmem:[%s194 + $0x18] sm:$0xff]
        %v228 = vld [vmem:[%s194 + $0x20] sm:$0xff]
        %v229 = vld [vmem:[%s194 + $0x28] sm:$0xff]
        %v230 = vld [vmem:[%s194 + $0x30] sm:$0xff]
        %v231 = vld [vmem:[%s194 + $0x38] sm:$0xff]
        %v232 = vld [vmem:[%s194 + $0x40] sm:$0xff]
        %v233 = vld [vmem:[%s194 + $0x48] sm:$0xff]
        %v234 = vld [vmem:[%s194 + $0x50] sm:$0xff]
        %v235 = vld [vmem:[%s194 + $0x58] sm:$0xff]
        %v236 = vld [vmem:[%s194 + $0x60] sm:$0xff]
        %v237 = vld [vmem:[%s194 + $0x68] sm:$0xff]
        %v238 = vld [vmem:[%s194 + $0x70] sm:$0xff]
        %v239 = vld [vmem:[%s194 + $0x78] sm:$0xff]
        %240 = vxpose.xlu0.b32.start [1/16] %v223, 128
        %241 = vxpose.xlu0.b32.cont [2/16] 0.0, 128
        %242 = vxpose.xlu0.b32.cont [3/16] 0.0, 128
        %243 = vxpose.xlu0.b32.cont [4/16] 0.0, 128
        %244 = vxpose.xlu0.b32.cont [5/16] 0.0, 128
        %245 = vxpose.xlu0.b32.cont [6/16] 0.0, 128
        %246 = vxpose.xlu0.b32.cont [7/16] 0.0, 128
        %247 = vxpose.xlu0.b32.cont [8/16] 0.0, 128
        %248 = vxpose.xlu0.b32.cont [9/16] 0.0, 128
        %249 = vxpose.xlu0.b32.cont [10/16] 0.0, 128
        %250 = vxpose.xlu0.b32.cont [11/16] 0.0, 128
        %251 = vxpose.xlu0.b32.cont [12/16] 0.0, 128
        %252 = vxpose.xlu0.b32.cont [13/16] 0.0, 128
        %253 = vxpose.xlu0.b32.cont [14/16] 0.0, 128
        %254 = vxpose.xlu0.b32.cont [15/16] 0.0, 128
        %255 = vxpose.xlu0.b32.end [16/16] 0.0, 128
        %v256 = vpop.trf.xlu0
        %v257 = vpop.trf.xlu0
        %v258 = vpop.trf.xlu0
        %v259 = vpop.trf.xlu0
        %v260 = vpop.trf.xlu0
        %v261 = vpop.trf.xlu0
        %v262 = vpop.trf.xlu0
        %v263 = vpop.trf.xlu0
        %v264 = vpop.trf.xlu0
        %v265 = vpop.trf.xlu0
        %v266 = vpop.trf.xlu0
        %v267 = vpop.trf.xlu0
        %v268 = vpop.trf.xlu0
        %v269 = vpop.trf.xlu0
        %v270 = vpop.trf.xlu0
        %v271 = vpop.trf.xlu0
        %vm272 = vcmask 64512
        %v274 = vsel %vm272, %v256, 0
        %v277 = vsel %vm272, %v257, 0
        %v280 = vsel %vm272, %v258, 0
        %v283 = vsel %vm272, %v259, 0
        %v286 = vsel %vm272, %v260, 0
        %v289 = vsel %vm272, %v261, 0
        %v292 = vsel %vm272, %v262, 0
        %v295 = vsel %vm272, %v263, 0
        %v298 = vsel %vm272, %v264, 0
        %v301 = vsel %vm272, %v265, 0
        %v304 = vsel %vm272, %v266, 0
        %v307 = vsel %vm272, %v267, 0
        %v310 = vsel %vm272, %v268, 0
        %v313 = vsel %vm272, %v269, 0
        %v316 = vsel %vm272, %v270, 0
        %v319 = vsel %vm272, %v271, 0
        %321 = vmatprep.subr.mxu0 0.0
        %322 = vmatpush1.msra.mxu0 %v223
        %323 = vmatprep.subr.mxu0 0.0
        %324 = vmatpush1.msra.mxu0 0.0
        %325 = vmatprep.subr.mxu0 0.0
        %326 = vmatpush1.msra.mxu0 0.0
        %327 = vmatprep.subr.mxu0 0.0
        %328 = vmatpush1.msra.mxu0 0.0
        %329 = vmatprep.subr.mxu0 0.0
        %330 = vmatpush1.msra.mxu0 0.0
        %331 = vmatprep.subr.mxu0 0.0
        %332 = vmatpush1.msra.mxu0 0.0
        %333 = vmatprep.subr.mxu0 0.0
        %334 = vmatpush1.msra.mxu0 0.0
        %335 = vmatprep.subr.mxu0 0.0
        %336 = vmatpush1.msra.mxu0 0.0
        %337 = vmatprep.subr.mxu0 0.0
        %338 = vmatpush1.msra.mxu0 0.0
        %339 = vmatprep.subr.mxu0 0.0
        %340 = vmatpush1.msra.mxu0 0.0
        %341 = vmatprep.subr.mxu0 0.0
        %342 = vmatpush1.msra.mxu0 0.0
        %343 = vmatprep.subr.mxu0 0.0
        %344 = vmatpush1.msra.mxu0 0.0
        %345 = vmatprep.subr.mxu0 0.0
        %346 = vmatpush1.msra.mxu0 0.0
        %347 = vmatprep.subr.mxu0 0.0
        %348 = vmatpush1.msra.mxu0 0.0
        %349 = vmatprep.subr.mxu0 0.0
        %350 = vmatpush1.msra.mxu0 0.0
        %351 = vmatprep.subr.mxu0 0.0
        %352 = vmatpush1.msra.mxu0 0.0
        %353 = vmatprep.subr.mxu0 0.0
        %354 = vmatpush1.msra.mxu0 0.0
        %355 = vmatprep.subr.mxu0 0.0
        %356 = vmatpush1.msra.mxu0 0.0
        %357 = vmatprep.subr.mxu0 0.0
        %358 = vmatpush1.msra.mxu0 0.0
        %359 = vmatprep.subr.mxu0 0.0
        %360 = vmatpush1.msra.mxu0 0.0
        %361 = vmatprep.subr.mxu0 0.0
        %362 = vmatpush1.msra.mxu0 0.0
        %363 = vmatprep.subr.mxu0 0.0
        %364 = vmatpush1.msra.mxu0 0.0
        %365 = vmatprep.subr.mxu0 0.0
        %366 = vmatpush1.msra.mxu0 0.0
        %367 = vmatprep.subr.mxu0 0.0
        %368 = vmatpush1.msra.mxu0 0.0
        %369 = vmatprep.subr.mxu0 0.0
        %370 = vmatpush1.msra.mxu0 0.0
        %371 = vmatprep.subr.mxu0 0.0
        %372 = vmatpush1.msra.mxu0 0.0
        %373 = vmatprep.subr.mxu0 0.0
        %374 = vmatpush1.msra.mxu0 0.0
        %375 = vmatprep.subr.mxu0 0.0
        %376 = vmatpush1.msra.mxu0 0.0
        %377 = vmatprep.subr.mxu0 0.0
        %378 = vmatpush1.msra.mxu0 0.0
        %379 = vmatprep.subr.mxu0 0.0
        %380 = vmatpush1.msra.mxu0 0.0
        %381 = vmatprep.subr.mxu0 0.0
        %382 = vmatpush1.msra.mxu0 0.0
        %383 = vmatprep.subr.mxu0 0.0
        %384 = vmatpush1.msra.mxu0 0.0
        %385 = vmatprep.mubr.f32.mxu0 0.0
        %386 = vmatmul.mubr.f32.gmra.mrb[0].mxu0 %v274
        %v387 = vpop.f32.mrb[0].mxu0
        %v388 = vadd.f32 0.0, %v387
        %v389 = vpop.f32.mrb[0].mxu0
        %390 = vmatprep.mubr.f32.mxu0 0.0
        %391 = vmatmul.mubr.f32.gmra.mrb[0].mxu0 %v277
        %v392 = vpop.f32.mrb[0].mxu0
        %v393 = vadd.f32 0.0, %v392
        %v394 = vpop.f32.mrb[0].mxu0
        %395 = vmatprep.mubr.f32.mxu0 0.0
        %396 = vmatmul.mubr.f32.gmra.mrb[0].mxu0 %v280
        %v397 = vpop.f32.mrb[0].mxu0
        %v398 = vadd.f32 0.0, %v397
        %v399 = vpop.f32.mrb[0].mxu0
        %400 = vmatprep.mubr.f32.mxu0 0.0
        %401 = vmatmul.mubr.f32.gmra.mrb[0].mxu0 %v283
        %v402 = vpop.f32.mrb[0].mxu0
        %v403 = vadd.f32 0.0, %v402
        %v404 = vpop.f32.mrb[0].mxu0
        %405 = vmatprep.mubr.f32.mxu0 0.0
        %406 = vmatmul.mubr.f32.gmra.mrb[0].mxu0 %v286
        %v407 = vpop.f32.mrb[0].mxu0
        %v408 = vadd.f32 0.0, %v407
        %v409 = vpop.f32.mrb[0].mxu0
        %410 = vmatprep.mubr.f32.mxu0 0.0
        %411 = vmatmul.mubr.f32.gmra.mrb[0].mxu0 %v289
        %v412 = vpop.f32.mrb[0].mxu0
        %v413 = vadd.f32 0.0, %v412
        %v414 = vpop.f32.mrb[0].mxu0
        %415 = vmatprep.mubr.f32.mxu0 0.0
        %416 = vmatmul.mubr.f32.gmra.mrb[0].mxu0 %v292
        %v417 = vpop.f32.mrb[0].mxu0
        %v418 = vadd.f32 0.0, %v417
        %v419 = vpop.f32.mrb[0].mxu0
        %420 = vmatprep.mubr.f32.mxu0 0.0
        %421 = vmatmul.mubr.f32.gmra.mrb[0].mxu0 %v295
        %v422 = vpop.f32.mrb[0].mxu0
        %v423 = vadd.f32 0.0, %v422
        %v424 = vpop.f32.mrb[0].mxu0
        %425 = vmatprep.mubr.f32.mxu0 0.0
        %426 = vmatmul.mubr.f32.gmra.mrb[0].mxu0 %v298
        %v427 = vpop.f32.mrb[0].mxu0
        %v428 = vadd.f32 0.0, %v427
        %v429 = vpop.f32.mrb[0].mxu0
        %430 = vmatprep.mubr.f32.mxu0 0.0
        %431 = vmatmul.mubr.f32.gmra.mrb[0].mxu0 %v301
        %v432 = vpop.f32.mrb[0].mxu0
        %v433 = vadd.f32 0.0, %v432
        %v434 = vpop.f32.mrb[0].mxu0
        %435 = vmatprep.mubr.f32.mxu0 0.0
        %436 = vmatmul.mubr.f32.gmra.mrb[0].mxu0 %v304
        %v437 = vpop.f32.mrb[0].mxu0
        %v438 = vadd.f32 0.0, %v437
        %v439 = vpop.f32.mrb[0].mxu0
        %440 = vmatprep.mubr.f32.mxu0 0.0
        %441 = vmatmul.mubr.f32.gmra.mrb[0].mxu0 %v307
        %v442 = vpop.f32.mrb[0].mxu0
        %v443 = vadd.f32 0.0, %v442
        %v444 = vpop.f32.mrb[0].mxu0
        %445 = vmatprep.mubr.f32.mxu0 0.0
        %446 = vmatmul.mubr.f32.gmra.mrb[0].mxu0 %v310
        %v447 = vpop.f32.mrb[0].mxu0
        %v448 = vadd.f32 0.0, %v447
        %v449 = vpop.f32.mrb[0].mxu0
        %450 = vmatprep.mubr.f32.mxu0 0.0
        %451 = vmatmul.mubr.f32.gmra.mrb[0].mxu0 %v313
        %v452 = vpop.f32.mrb[0].mxu0
        %v453 = vadd.f32 0.0, %v452
        %v454 = vpop.f32.mrb[0].mxu0
        %455 = vmatprep.mubr.f32.mxu0 0.0
        %456 = vmatmul.mubr.f32.gmra.mrb[0].mxu0 %v316
        %v457 = vpop.f32.mrb[0].mxu0
        %v458 = vadd.f32 0.0, %v457
        %v459 = vpop.f32.mrb[0].mxu0
        %460 = vmatprep.mubr.f32.mxu0 0.0
        %461 = vmatmul.mubr.f32.gmra.mrb[0].mxu0 %v319
        %v462 = vpop.f32.mrb[0].mxu0
        %v463 = vadd.f32 0.0, %v462
        %v464 = vpop.f32.mrb[0].mxu0
        %465 = vdwg.mxu0
        %v466 = vadd.f32 %v224, %v388
        %v467 = vadd.f32 %v225, %v393
        %v468 = vadd.f32 %v226, %v398
        %v469 = vadd.f32 %v227, %v403
        %v470 = vadd.f32 %v228, %v408
        %v471 = vadd.f32 %v229, %v413
        %v472 = vadd.f32 %v230, %v418
        %v473 = vadd.f32 %v231, %v423
        %v474 = vadd.f32 %v232, %v428
        %v475 = vadd.f32 %v233, %v433
        %v476 = vadd.f32 %v234, %v438
        %v477 = vadd.f32 %v235, %v443
        %v478 = vadd.f32 %v236, %v448
        %v479 = vadd.f32 %v237, %v453
        %v480 = vadd.f32 %v238, %v458
        %v481 = vadd.f32 %v239, %v463
        %482 = vst [vmem:[%s194] sm:$0xff] %v466
        %483 = vst [vmem:[%s194 + $0x8] sm:$0xff] %v467
        %484 = vst [vmem:[%s194 + $0x10] sm:$0xff] %v468
        %485 = vst [vmem:[%s194 + $0x18] sm:$0xff] %v469
        %486 = vst [vmem:[%s194 + $0x20] sm:$0xff] %v470
        %487 = vst [vmem:[%s194 + $0x28] sm:$0xff] %v471
        %488 = vst [vmem:[%s194 + $0x30] sm:$0xff] %v472
        %489 = vst [vmem:[%s194 + $0x38] sm:$0xff] %v473
        %490 = vst [vmem:[%s194 + $0x40] sm:$0xff] %v474
        %491 = vst [vmem:[%s194 + $0x48] sm:$0xff] %v475
        %492 = vst [vmem:[%s194 + $0x50] sm:$0xff] %v476
        %493 = vst [vmem:[%s194 + $0x58] sm:$0xff] %v477
        %494 = vst [vmem:[%s194 + $0x60] sm:$0xff] %v478
        %495 = vst [vmem:[%s194 + $0x68] sm:$0xff] %v479
        %496 = vst [vmem:[%s194 + $0x70] sm:$0xff] %v480
        %497 = vst [vmem:[%s194 + $0x78] sm:$0xff] %v481
        %v498 = vld [vmem:[#allocation2] sm:$0xff]
        %v499 = vadd.f32 %v223, 0.0
        %v500 = vadd.f32 %v498, %v499
        %501 = vst [vmem:[#allocation2] sm:$0xff] %v500
        // Predicated region
        $region37: #{tpu_custom_call.1} parent=27 // pred_check
          %p502 = pneg %p202
        $region38: #{tpu_custom_call.1} parent=27 // pred_check_branch
          %504 = sbr.rel (%p502) target = $region40
        $region39: #{tpu_custom_call.1} parent=27 // pred_region
          %v505 = vld [vmem:[#allocation2] sm:$0xff]
          %v506 = vrot.slane %v505, 4
          %v507 = vadd.f32 %v505, %v506
          %v508 = vrot.slane %v507, 2
          %v509 = vadd.f32 %v507, %v508
          %v510 = vrot.slane %v509, 1
          %v511 = vadd.f32 %v509, %v510
          %512 = vxpose.xlu0.b32.start [1/16] %v511, 128
          %513 = vxpose.xlu0.b32.cont [2/16] 0.0, 128
          %514 = vxpose.xlu0.b32.cont [3/16] 0.0, 128
          %515 = vxpose.xlu0.b32.cont [4/16] 0.0, 128
          %516 = vxpose.xlu0.b32.cont [5/16] 0.0, 128
          %517 = vxpose.xlu0.b32.cont [6/16] 0.0, 128
          %518 = vxpose.xlu0.b32.cont [7/16] 0.0, 128
          %519 = vxpose.xlu0.b32.cont [8/16] 0.0, 128
          %520 = vxpose.xlu0.b32.cont [9/16] 0.0, 128
          %521 = vxpose.xlu0.b32.cont [10/16] 0.0, 128
          %522 = vxpose.xlu0.b32.cont [11/16] 0.0, 128
          %523 = vxpose.xlu0.b32.cont [12/16] 0.0, 128
          %524 = vxpose.xlu0.b32.cont [13/16] 0.0, 128
          %525 = vxpose.xlu0.b32.cont [14/16] 0.0, 128
          %526 = vxpose.xlu0.b32.cont [15/16] 0.0, 128
          %527 = vxpose.xlu0.b32.end [16/16] 0.0, 128
          %v528 = vpop.trf.xlu0
          %v529 = vpop.trf.xlu0
          %v530 = vpop.trf.xlu0
          %v531 = vpop.trf.xlu0
          %v532 = vpop.trf.xlu0
          %v533 = vpop.trf.xlu0
          %v534 = vpop.trf.xlu0
          %v535 = vpop.trf.xlu0
          %v536 = vpop.trf.xlu0
          %v537 = vpop.trf.xlu0
          %v538 = vpop.trf.xlu0
          %v539 = vpop.trf.xlu0
          %v540 = vpop.trf.xlu0
          %v541 = vpop.trf.xlu0
          %v542 = vpop.trf.xlu0
          %v543 = vpop.trf.xlu0
          %vm544 = vcmask 7168
          %v546 = vsel %vm544, %v528, 0
          %v549 = vsel %vm544, %v529, 0
          %v552 = vsel %vm544, %v530, 0
          %v555 = vsel %vm544, %v531, 0
          %v558 = vsel %vm544, %v532, 0
          %v561 = vsel %vm544, %v533, 0
          %v564 = vsel %vm544, %v534, 0
          %v567 = vsel %vm544, %v535, 0
          %v570 = vsel %vm544, %v536, 0
          %v573 = vsel %vm544, %v537, 0
          %v576 = vsel %vm544, %v538, 0
          %v579 = vsel %vm544, %v539, 0
          %v582 = vsel %vm544, %v540, 0
          %v585 = vsel %vm544, %v541, 0
          %v588 = vsel %vm544, %v542, 0
          %v591 = vsel %vm544, %v543, 0
          %vm593 = vcmask 1040384
          %v595 = vsel %vm593, %v511, 0
          %597 = vmatprep.subr.mxu0 0.0
          %598 = vmatpush1.msra.mxu0 %v595
          %599 = vmatprep.subr.mxu0 0.0
          %600 = vmatpush1.msra.mxu0 0.0
          %601 = vmatprep.subr.mxu0 0.0
          %602 = vmatpush1.msra.mxu0 0.0
          %603 = vmatprep.subr.mxu0 0.0
          %604 = vmatpush1.msra.mxu0 0.0
          %605 = vmatprep.subr.mxu0 0.0
          %606 = vmatpush1.msra.mxu0 0.0
          %607 = vmatprep.subr.mxu0 0.0
          %608 = vmatpush1.msra.mxu0 0.0
          %609 = vmatprep.subr.mxu0 0.0
          %610 = vmatpush1.msra.mxu0 0.0
          %611 = vmatprep.subr.mxu0 0.0
          %612 = vmatpush1.msra.mxu0 0.0
          %613 = vmatprep.subr.mxu0 0.0
          %614 = vmatpush1.msra.mxu0 0.0
          %615 = vmatprep.subr.mxu0 0.0
          %616 = vmatpush1.msra.mxu0 0.0
          %617 = vmatprep.subr.mxu0 0.0
          %618 = vmatpush1.msra.mxu0 0.0
          %619 = vmatprep.subr.mxu0 0.0
          %620 = vmatpush1.msra.mxu0 0.0
          %621 = vmatprep.subr.mxu0 0.0
          %622 = vmatpush1.msra.mxu0 0.0
          %623 = vmatprep.subr.mxu0 0.0
          %624 = vmatpush1.msra.mxu0 0.0
          %625 = vmatprep.subr.mxu0 0.0
          %626 = vmatpush1.msra.mxu0 0.0
          %627 = vmatprep.subr.mxu0 0.0
          %628 = vmatpush1.msra.mxu0 0.0
          %629 = vmatprep.subr.mxu0 0.0
          %630 = vmatpush1.msra.mxu0 0.0
          %631 = vmatprep.subr.mxu0 0.0
          %632 = vmatpush1.msra.mxu0 0.0
          %633 = vmatprep.subr.mxu0 0.0
          %634 = vmatpush1.msra.mxu0 0.0
          %635 = vmatprep.subr.mxu0 0.0
          %636 = vmatpush1.msra.mxu0 0.0
          %637 = vmatprep.subr.mxu0 0.0
          %638 = vmatpush1.msra.mxu0 0.0
          %639 = vmatprep.subr.mxu0 0.0
          %640 = vmatpush1.msra.mxu0 0.0
          %641 = vmatprep.subr.mxu0 0.0
          %642 = vmatpush1.msra.mxu0 0.0
          %643 = vmatprep.subr.mxu0 0.0
          %644 = vmatpush1.msra.mxu0 0.0
          %645 = vmatprep.subr.mxu0 0.0
          %646 = vmatpush1.msra.mxu0 0.0
          %647 = vmatprep.subr.mxu0 0.0
          %648 = vmatpush1.msra.mxu0 0.0
          %649 = vmatprep.subr.mxu0 0.0
          %650 = vmatpush1.msra.mxu0 0.0
          %651 = vmatprep.subr.mxu0 0.0
          %652 = vmatpush1.msra.mxu0 0.0
          %653 = vmatprep.subr.mxu0 0.0
          %654 = vmatpush1.msra.mxu0 0.0
          %655 = vmatprep.subr.mxu0 0.0
          %656 = vmatpush1.msra.mxu0 0.0
          %657 = vmatprep.subr.mxu0 0.0
          %658 = vmatpush1.msra.mxu0 0.0
          %659 = vmatprep.subr.mxu0 0.0
          %660 = vmatpush1.msra.mxu0 0.0
          %661 = vmatprep.mubr.f32.mxu0 0.0
          %662 = vmatmul.mubr.f32.gmra.mrb[0].mxu0 %v546
          %v663 = vpop.f32.mrb[0].mxu0
          %v664 = vadd.f32 0.0, %v663
          %v665 = vpop.f32.mrb[0].mxu0
          %666 = vmatprep.mubr.f32.mxu0 0.0
          %667 = vmatmul.mubr.f32.gmra.mrb[0].mxu0 %v549
          %v668 = vpop.f32.mrb[0].mxu0
          %v669 = vadd.f32 0.0, %v668
          %v670 = vpop.f32.mrb[0].mxu0
          %671 = vmatprep.mubr.f32.mxu0 0.0
          %672 = vmatmul.mubr.f32.gmra.mrb[0].mxu0 %v552
          %v673 = vpop.f32.mrb[0].mxu0
          %v674 = vadd.f32 0.0, %v673
          %v675 = vpop.f32.mrb[0].mxu0
          %676 = vmatprep.mubr.f32.mxu0 0.0
          %677 = vmatmul.mubr.f32.gmra.mrb[0].mxu0 %v555
          %v678 = vpop.f32.mrb[0].mxu0
          %v679 = vadd.f32 0.0, %v678
          %v680 = vpop.f32.mrb[0].mxu0
          %681 = vmatprep.mubr.f32.mxu0 0.0
          %682 = vmatmul.mubr.f32.gmra.mrb[0].mxu0 %v558
          %v683 = vpop.f32.mrb[0].mxu0
          %v684 = vadd.f32 0.0, %v683
          %v685 = vpop.f32.mrb[0].mxu0
          %686 = vmatprep.mubr.f32.mxu0 0.0
          %687 = vmatmul.mubr.f32.gmra.mrb[0].mxu0 %v561
          %v688 = vpop.f32.mrb[0].mxu0
          %v689 = vadd.f32 0.0, %v688
          %v690 = vpop.f32.mrb[0].mxu0
          %691 = vmatprep.mubr.f32.mxu0 0.0
          %692 = vmatmul.mubr.f32.gmra.mrb[0].mxu0 %v564
          %v693 = vpop.f32.mrb[0].mxu0
          %v694 = vadd.f32 0.0, %v693
          %v695 = vpop.f32.mrb[0].mxu0
          %696 = vmatprep.mubr.f32.mxu0 0.0
          %697 = vmatmul.mubr.f32.gmra.mrb[0].mxu0 %v567
          %v698 = vpop.f32.mrb[0].mxu0
          %v699 = vadd.f32 0.0, %v698
          %v700 = vpop.f32.mrb[0].mxu0
          %701 = vmatprep.mubr.f32.mxu0 0.0
          %702 = vmatmul.mubr.f32.gmra.mrb[0].mxu0 %v570
          %v703 = vpop.f32.mrb[0].mxu0
          %v704 = vadd.f32 0.0, %v703
          %v705 = vpop.f32.mrb[0].mxu0
          %706 = vmatprep.mubr.f32.mxu0 0.0
          %707 = vmatmul.mubr.f32.gmra.mrb[0].mxu0 %v573
          %v708 = vpop.f32.mrb[0].mxu0
          %v709 = vadd.f32 0.0, %v708
          %v710 = vpop.f32.mrb[0].mxu0
          %711 = vmatprep.mubr.f32.mxu0 0.0
          %712 = vmatmul.mubr.f32.gmra.mrb[0].mxu0 %v576
          %v713 = vpop.f32.mrb[0].mxu0
          %v714 = vadd.f32 0.0, %v713
          %v715 = vpop.f32.mrb[0].mxu0
          %716 = vmatprep.mubr.f32.mxu0 0.0
          %717 = vmatmul.mubr.f32.gmra.mrb[0].mxu0 %v579
          %v718 = vpop.f32.mrb[0].mxu0
          %v719 = vadd.f32 0.0, %v718
          %v720 = vpop.f32.mrb[0].mxu0
          %721 = vmatprep.mubr.f32.mxu0 0.0
          %722 = vmatmul.mubr.f32.gmra.mrb[0].mxu0 %v582
          %v723 = vpop.f32.mrb[0].mxu0
          %v724 = vadd.f32 0.0, %v723
          %v725 = vpop.f32.mrb[0].mxu0
          %726 = vmatprep.mubr.f32.mxu0 0.0
          %727 = vmatmul.mubr.f32.gmra.mrb[0].mxu0 %v585
          %v728 = vpop.f32.mrb[0].mxu0
          %v729 = vadd.f32 0.0, %v728
          %v730 = vpop.f32.mrb[0].mxu0
          %731 = vmatprep.mubr.f32.mxu0 0.0
          %732 = vmatmul.mubr.f32.gmra.mrb[0].mxu0 %v588
          %v733 = vpop.f32.mrb[0].mxu0
          %v734 = vadd.f32 0.0, %v733
          %v735 = vpop.f32.mrb[0].mxu0
          %736 = vmatprep.mubr.f32.mxu0 0.0
          %737 = vmatmul.mubr.f32.gmra.mrb[0].mxu0 %v591
          %v738 = vpop.f32.mrb[0].mxu0
          %v739 = vadd.f32 0.0, %v738
          %v740 = vpop.f32.mrb[0].mxu0
          %741 = vdwg.mxu0
          %v742 = vld [vmem:[%s194] sm:$0xff]
          %v743 = vld [vmem:[%s194 + $0x8] sm:$0xff]
          %v744 = vld [vmem:[%s194 + $0x10] sm:$0xff]
          %v745 = vld [vmem:[%s194 + $0x18] sm:$0xff]
          %v746 = vld [vmem:[%s194 + $0x20] sm:$0xff]
          %v747 = vld [vmem:[%s194 + $0x28] sm:$0xff]
          %v748 = vld [vmem:[%s194 + $0x30] sm:$0xff]
          %v749 = vld [vmem:[%s194 + $0x38] sm:$0xff]
          %v750 = vld [vmem:[%s194 + $0x40] sm:$0xff]
          %v751 = vld [vmem:[%s194 + $0x48] sm:$0xff]
          %v752 = vld [vmem:[%s194 + $0x50] sm:$0xff]
          %v753 = vld [vmem:[%s194 + $0x58] sm:$0xff]
          %v754 = vld [vmem:[%s194 + $0x60] sm:$0xff]
          %v755 = vld [vmem:[%s194 + $0x68] sm:$0xff]
          %v756 = vld [vmem:[%s194 + $0x70] sm:$0xff]
          %v757 = vld [vmem:[%s194 + $0x78] sm:$0xff]
          %v758 = vmul.f32 %v664, 0.125
          %v759 = vmul.f32 %v669, 0.125
          %v760 = vmul.f32 %v674, 0.125
          %v761 = vmul.f32 %v679, 0.125
          %v762 = vmul.f32 %v684, 0.125
          %v763 = vmul.f32 %v689, 0.125
          %v764 = vmul.f32 %v694, 0.125
          %v765 = vmul.f32 %v699, 0.125
          %v766 = vmul.f32 %v704, 0.125
          %v767 = vmul.f32 %v709, 0.125
          %v768 = vmul.f32 %v714, 0.125
          %v769 = vmul.f32 %v719, 0.125
          %v770 = vmul.f32 %v724, 0.125
          %v771 = vmul.f32 %v729, 0.125
          %v772 = vmul.f32 %v734, 0.125
          %v773 = vmul.f32 %v739, 0.125
          %v774 = vsub.f32 %v742, %v758
          %v775 = vsub.f32 %v743, %v759
          %v776 = vsub.f32 %v744, %v760
          %v777 = vsub.f32 %v745, %v761
          %v778 = vsub.f32 %v746, %v762
          %v779 = vsub.f32 %v747, %v763
          %v780 = vsub.f32 %v748, %v764
          %v781 = vsub.f32 %v749, %v765
          %v782 = vsub.f32 %v750, %v766
          %v783 = vsub.f32 %v751, %v767
          %v784 = vsub.f32 %v752, %v768
          %v785 = vsub.f32 %v753, %v769
          %v786 = vsub.f32 %v754, %v770
          %v787 = vsub.f32 %v755, %v771
          %v788 = vsub.f32 %v756, %v772
          %v789 = vsub.f32 %v757, %v773
          %v790 = vmul.f32 %v774, 0.125
          %v791 = vmul.f32 %v775, 0.125
          %v792 = vmul.f32 %v776, 0.125
          %v793 = vmul.f32 %v777, 0.125
          %v794 = vmul.f32 %v778, 0.125
          %v795 = vmul.f32 %v779, 0.125
          %v796 = vmul.f32 %v780, 0.125
          %v797 = vmul.f32 %v781, 0.125
          %v798 = vmul.f32 %v782, 0.125
          %v799 = vmul.f32 %v783, 0.125
          %v800 = vmul.f32 %v784, 0.125
          %v801 = vmul.f32 %v785, 0.125
          %v802 = vmul.f32 %v786, 0.125
          %v803 = vmul.f32 %v787, 0.125
          %v804 = vmul.f32 %v788, 0.125
          %v805 = vmul.f32 %v789, 0.125
          %v806 = vld [vmem:[%s167] sm:$0xff]
          %v807 = vld [vmem:[%s167 + $0x8] sm:$0xff]
          %v808 = vld [vmem:[%s167 + $0x10] sm:$0xff]
          %v809 = vld [vmem:[%s167 + $0x18] sm:$0xff]
          %v810 = vld [vmem:[%s167 + $0x20] sm:$0xff]
          %v811 = vld [vmem:[%s167 + $0x28] sm:$0xff]
          %v812 = vld [vmem:[%s167 + $0x30] sm:$0xff]
          %v813 = vld [vmem:[%s167 + $0x38] sm:$0xff]
          %v814 = vld [vmem:[%s167 + $0x40] sm:$0xff]
          %v815 = vld [vmem:[%s167 + $0x48] sm:$0xff]
          %v816 = vld [vmem:[%s167 + $0x50] sm:$0xff]
          %v817 = vld [vmem:[%s167 + $0x58] sm:$0xff]
          %v818 = vld [vmem:[%s167 + $0x60] sm:$0xff]
          %v819 = vld [vmem:[%s167 + $0x68] sm:$0xff]
          %v820 = vld [vmem:[%s167 + $0x70] sm:$0xff]
          %v821 = vld [vmem:[%s167 + $0x78] sm:$0xff]
          %v822 = vmul.f32 %v806, 0.01
          %v823 = vmul.f32 %v807, 0.01
          %v824 = vmul.f32 %v808, 0.01
          %v825 = vmul.f32 %v809, 0.01
          %v826 = vmul.f32 %v810, 0.01
          %v827 = vmul.f32 %v811, 0.01
          %v828 = vmul.f32 %v812, 0.01
          %v829 = vmul.f32 %v813, 0.01
          %v830 = vmul.f32 %v814, 0.01
          %v831 = vmul.f32 %v815, 0.01
          %v832 = vmul.f32 %v816, 0.01
          %v833 = vmul.f32 %v817, 0.01
          %v834 = vmul.f32 %v818, 0.01
          %v835 = vmul.f32 %v819, 0.01
          %v836 = vmul.f32 %v820, 0.01
          %v837 = vmul.f32 %v821, 0.01
          %v838 = vmul.f32 %v790, 0.99
          %v839 = vmul.f32 %v791, 0.99
          %v840 = vmul.f32 %v792, 0.99
          %v841 = vmul.f32 %v793, 0.99
          %v842 = vmul.f32 %v794, 0.99
          %v843 = vmul.f32 %v795, 0.99
          %v844 = vmul.f32 %v796, 0.99
          %v845 = vmul.f32 %v797, 0.99
          %v846 = vmul.f32 %v798, 0.99
          %v847 = vmul.f32 %v799, 0.99
          %v848 = vmul.f32 %v800, 0.99
          %v849 = vmul.f32 %v801, 0.99
          %v850 = vmul.f32 %v802, 0.99
          %v851 = vmul.f32 %v803, 0.99
          %v852 = vmul.f32 %v804, 0.99
          %v853 = vmul.f32 %v805, 0.99
          %v854 = vadd.f32 %v822, %v838
          %v855 = vadd.f32 %v823, %v839
          %v856 = vadd.f32 %v824, %v840
          %v857 = vadd.f32 %v825, %v841
          %v858 = vadd.f32 %v826, %v842
          %v859 = vadd.f32 %v827, %v843
          %v860 = vadd.f32 %v828, %v844
          %v861 = vadd.f32 %v829, %v845
          %v862 = vadd.f32 %v830, %v846
          %v863 = vadd.f32 %v831, %v847
          %v864 = vadd.f32 %v832, %v848
          %v865 = vadd.f32 %v833, %v849
          %v866 = vadd.f32 %v834, %v850
          %v867 = vadd.f32 %v835, %v851
          %v868 = vadd.f32 %v836, %v852
          %v869 = vadd.f32 %v837, %v853
          %870 = vst [vmem:[%s194] sm:$0xff] %v854
          %871 = vst [vmem:[%s194 + $0x8] sm:$0xff] %v855
          %872 = vst [vmem:[%s194 + $0x10] sm:$0xff] %v856
          %873 = vst [vmem:[%s194 + $0x18] sm:$0xff] %v857
          %874 = vst [vmem:[%s194 + $0x20] sm:$0xff] %v858
          %875 = vst [vmem:[%s194 + $0x28] sm:$0xff] %v859
          %876 = vst [vmem:[%s194 + $0x30] sm:$0xff] %v860
          %877 = vst [vmem:[%s194 + $0x38] sm:$0xff] %v861
          %878 = vst [vmem:[%s194 + $0x40] sm:$0xff] %v862
          %879 = vst [vmem:[%s194 + $0x48] sm:$0xff] %v863
          %880 = vst [vmem:[%s194 + $0x50] sm:$0xff] %v864
          %881 = vst [vmem:[%s194 + $0x58] sm:$0xff] %v865
          %882 = vst [vmem:[%s194 + $0x60] sm:$0xff] %v866
          %883 = vst [vmem:[%s194 + $0x68] sm:$0xff] %v867
          %884 = vst [vmem:[%s194 + $0x70] sm:$0xff] %v868
          %885 = vst [vmem:[%s194 + $0x78] sm:$0xff] %v869
        $region40: #{tpu_custom_call.1} parent=27 // pred_fallthru
          _
        %s886 = sand.u32 %s93, 1
        %s887 = scalar_lea.sflag [#allocation5], %s886
        %s888 = sand.u32 %s93, 1
        %s889 = smul.addr %s888, 128
        %s890 = scalar_lea.vmem [#allocation6], %s889
        // Predicated region
        $region41: #{tpu_custom_call.1} parent=27 // pred_check
          %p891 = pneg %p103
        $region42: #{tpu_custom_call.1} parent=27 // pred_check_branch
          %893 = sbr.rel (%p891) target = $region44
        $region43: #{tpu_custom_call.1} parent=27 // pred_region
          %s895 = ssub.s32 2048, 2048
          %896 = vsyncadd %s887, %s895
          %s897 = smul.addr %s23, 16
          %s898 = smul.addr %s897, 128
          %s899 = scalar_lea.hbm %s2, %s898
          %s900 = sshll.u32 %s890, 4
          %s901 = int_to_ptr.vmem [resolvable:$true] %s900
          %906 = dma.vmem_to_hbm [thread:$0]  %s901, 2048, %s899, %s887, 128, 128, 8
        $region44: #{tpu_custom_call.1} parent=27 // pred_fallthru
          _
      $region28: #{tpu_custom_call.1} parent=5 // pred_fallthru
        _
      %p907 = scmp.le.s32.totalorder 2, %s14
      // Predicated region
      $region45: #{tpu_custom_call.1} parent=5 // pred_check
        %p908 = pneg %p907
      $region46: #{tpu_custom_call.1} parent=5 // pred_check_branch
        %910 = sbr.rel (%p908) target = $region48
      $region47: #{tpu_custom_call.1} parent=5 // pred_region
        %s911 = ssub.s32 %s14, 2
        // Predicated region
        $region49: #{tpu_custom_call.1} parent=47 // pred_check
          %p912 = pneg %p109
        $region50: #{tpu_custom_call.1} parent=47 // pred_check_branch
          %914 = sbr.rel (%p912) target = $region52
        $region51: #{tpu_custom_call.1} parent=47 // pred_region
          %s915 = sand.u32 %s94, 1
          %s916 = scalar_lea.sflag [#allocation5], %s915
          %s917 = sand.u32 %s94, 1
          %s918 = smul.addr %s917, 128
          %s919 = scalar_lea.vmem [#allocation6], %s918
          %920 = dma.done %s916, 2048
        $region52: #{tpu_custom_call.1} parent=47 // pred_fallthru
          _
      $region48: #{tpu_custom_call.1} parent=5 // pred_fallthru
        _
    $region6: #{tpu_custom_call.1} parent=1 // loop_footer
      %s18 = sadd.s32 1, %s14
    $region7: #{tpu_custom_call.1} parent=1 // loop_footer_branch
      %13 = sbr.rel target = $region3
    $region8: #{tpu_custom_call.1} parent=1 // loop_exit
      _
    %921 = vsyncpa [#allocation4], 1
    %s922 = scalar_lea.sflag [#allocation4], 1
    %923 = vsyncpa %s922, 1
    %924 = vsyncpa [#allocation5], 1
    %s925 = scalar_lea.sflag [#allocation5], 1
    %926 = vsyncpa %s925, 1

</llo_original>
